<compile_context>
chip_gen: v7x
topology: tpu7x:2x2x1
jax: 0.10.0
libtpu: 0.0.40
codegen_flags: <defaults>
</compile_context>

<pallas_src>
import jax
import jax.numpy as jnp
import numpy as np
from jax.experimental import pallas as pl
from jax.experimental.pallas import tpu as pltpu

BETA = 0.9    # LIF leak factor
V_TH = 0.75   # firing threshold


def _round_up(x, m):
    return ((x + m - 1) // m) * m


def _make_snn_kernel(compute_dtype, T):
    def snn_model_kernel(x_ref, w_enc_ref, b_enc_ref, w_dec_ref, b_dec_ref, out_ref):
        # x_ref: [BM*T, D] block (true D, no lane padding); weights are padded
        # (lane dims multiples of 128) and resident across the grid.
        BMT, D = x_ref.shape
        BM = BMT // T
        HP = w_enc_ref.shape[1]

        # --- encoder: single 2-D matmul on the MXU (M = BM*T, K = true D) ---
        x2d = x_ref[...].astype(compute_dtype)
        w_enc = w_enc_ref[...].astype(compute_dtype)
        enc2d = jnp.dot(x2d, w_enc, preferred_element_type=jnp.float32)
        enc2d = enc2d + b_enc_ref[...]                      # (1, HP) broadcast, f32
        enc = enc2d.reshape(BM, T, HP)                      # free when T % 8 == 0

        # --- snn: LIF recurrence, fully unrolled (T static), f32 state ---
        v = jnp.zeros((BM, HP), jnp.float32)
        spk_sum = jnp.zeros((BM, HP), jnp.float32)
        for t in range(T):                                  # unrolled; static index
            v = BETA * v + enc[:, t, :]
            spk = v > V_TH                                  # heaviside spike
            spk_sum = spk_sum + spk.astype(jnp.float32)
            v = jnp.where(spk, v - V_TH, v)                 # reset by subtraction

        # --- decoder: linear + log_softmax (full-lane, CP multiple of 128) ---
        w_dec = w_dec_ref[...].astype(compute_dtype)
        logits = jnp.dot(spk_sum.astype(compute_dtype), w_dec,
                         preferred_element_type=jnp.float32) + b_dec_ref[...]
        m = jnp.max(logits, axis=-1, keepdims=True)
        lse = m + jnp.log(jnp.sum(jnp.exp(logits - m), axis=-1, keepdims=True))
        out_ref[...] = logits - lse

    return snn_model_kernel


def snn_model_forward(x_btd, w_enc, b_enc, w_dec, b_dec,
                      compute_dtype=jnp.float32, block_b=128, target_grid_steps=4):
    """x_btd: [B, T, D]; returns log-probabilities [B, C].

    compute_dtype=jnp.bfloat16 is recommended on v6e/v7x for MXU peak (x and
    weights are then DMA'd in bf16; LIF state / accumulation stay f32).  The
    default is f32 so the test tolerance against the f32 reference stays tight.
    """
    B, T, D = x_btd.shape
    H = w_enc.shape[1]
    C = w_dec.shape[1]

    HP = _round_up(H, 128)
    CP = _round_up(C, 128)

    # Batch block: sublane multiple of 8, capped so the grid has at least
    # `target_grid_steps` steps (DMA overlap + megacore sharding) and batch
    # padding stays small.
    BM = max(8, _round_up(-(-B // max(1, target_grid_steps)), 8))
    BM = min(BM, max(8, block_b))
    BP = _round_up(B, BM)
    grid = (BP // BM,)

    io_dtype = jnp.dtype(compute_dtype)
    f32 = jnp.float32

    # x handed over flattened [BP*T, D] in the compute dtype; batch pad only
    # when needed (no feature-dim padding of the large stream).
    x2d = x_btd.reshape(B * T, D).astype(io_dtype)
    if BP != B:
        xp = jnp.zeros((BP * T, D), io_dtype).at[:B * T].set(x2d)
    else:
        xp = x2d

    w_enc_p = jnp.zeros((D, HP), io_dtype).at[:, :H].set(w_enc.astype(io_dtype))
    b_enc_p = jnp.zeros((1, HP), f32).at[:, :H].set(b_enc.astype(f32))
    w_dec_p = jnp.zeros((HP, CP), io_dtype).at[:H, :C].set(w_dec.astype(io_dtype))
    # Padded class lanes get a huge negative bias so they contribute ~0 to the
    # f32 softmax denominator -> no in-kernel masking, lane-dense stores.
    b_dec_p = jnp.full((1, CP), -1e30, f32).at[:, :C].set(b_dec.astype(f32))

    # VMEM budget from the actual per-block footprint, clamped per-generation.
    esz = io_dtype.itemsize
    x_blk = BM * T * D * esz
    out_blk = BM * CP * 4
    w_total = (D * HP + HP * CP) * esz + (HP + CP) * 4
    live = (BM * T * HP + 4 * BM * HP) * 4           # encoder out + LIF state (f32)
    need = 2 * (x_blk + out_blk) + 2 * w_total + live
    try:
        vmem_cap = int(pltpu.get_tpu_info().vmem_capacity_bytes)
    except Exception:
        vmem_cap = 64 << 20                          # v7x physical VMEM (smallest)
    vmem_limit = int(min(max(2 * need, 16 << 20), int(0.6 * vmem_cap)))

    # Cost hint with true sizes / dtypes, un-padded batch rows.
    flops = 2 * B * T * D * H + 2 * B * H * C + 5 * B * T * H
    bytes_accessed = (BP * T * D * esz
                      + (D * HP + HP * CP) * esz + (HP + CP) * 4
                      + BP * CP * 4)
    transcendentals = B * C

    out_padded = pl.pallas_call(
        _make_snn_kernel(compute_dtype, T),
        out_shape=jax.ShapeDtypeStruct((BP, CP), jnp.float32),
        grid=grid,
        in_specs=[
            pl.BlockSpec((BM * T, D), lambda i: (i, 0)),   # x: batch-blocked, true D
            pl.BlockSpec((D, HP), lambda i: (0, 0)),       # w_enc (resident)
            pl.BlockSpec((1, HP), lambda i: (0, 0)),       # b_enc
            pl.BlockSpec((HP, CP), lambda i: (0, 0)),      # w_dec
            pl.BlockSpec((1, CP), lambda i: (0, 0)),       # b_dec (-1e30 pad lanes)
        ],
        out_specs=pl.BlockSpec((BM, CP), lambda i: (i, 0)),  # lane-dense output
        compiler_params=pltpu.CompilerParams(
            dimension_semantics=("parallel",),
            vmem_limit_bytes=vmem_limit),
        cost_estimate=pl.CostEstimate(
            flops=flops, transcendentals=transcendentals,
            bytes_accessed=bytes_accessed),
    )(xp, w_enc_p, b_enc_p, w_dec_p, b_dec_p)

    return out_padded[:B, :C]


def reference_forward(x_btd, w_enc, b_enc, w_dec, b_dec):
    """Pure-JAX reference mirroring the PyTorch semantics."""
    enc = jnp.einsum('btd,dh->bth', x_btd, w_enc) + b_enc      # encoder
    B, T, H = enc.shape
    v = jnp.zeros((B, H), jnp.float32)
    spk_sum = jnp.zeros((B, H), jnp.float32)
    for t in range(T):                                         # snn (LIF)
        v = BETA * v + enc[:, t, :]
        spk = (v > V_TH).astype(jnp.float32)
        v = v - spk * V_TH
        spk_sum = spk_sum + spk
    logits = spk_sum @ w_dec + b_dec                           # decoder
    return jax.nn.log_softmax(logits, axis=-1)


if __name__ == "__main__":
    B, T, D_IN, H, C = 2, 8, 32, 64, 10

    key = jax.random.PRNGKey(0)
    kx, ke, kbe, kd, kbd = jax.random.split(key, 5)
    x = jax.random.normal(kx, (B, T, D_IN), dtype=jnp.float32)
    w_enc = jax.random.normal(ke, (D_IN, H), dtype=jnp.float32) * (1.0 / np.sqrt(D_IN))
    b_enc = jax.random.normal(kbe, (1, H), dtype=jnp.float32) * 0.1
    w_dec = jax.random.normal(kd, (H, C), dtype=jnp.float32) * (1.0 / np.sqrt(H))
    b_dec = jax.random.normal(kbd, (1, C), dtype=jnp.float32) * 0.1

    log_p_y = snn_model_forward(x, w_enc, b_enc, w_dec, b_dec)
    jax.block_until_ready(log_p_y)

    ref = reference_forward(x, w_enc, b_enc, w_dec, b_dec)
    assert log_p_y.shape == (B, C)
    assert np.allclose(np.asarray(log_p_y), np.asarray(ref), atol=1e-4), "mismatch vs reference"

    print("KERNEL_OK")
</pallas_src>

<mosaic_0001>
module attributes {stable_mosaic.version = 11 : i64} {
  func.func @snn_model_kernel(%arg0: i32, %arg1: memref<64x32xf32, #tpu.memory_space<vmem>>, %arg2: memref<32x128xf32, #tpu.memory_space<vmem>>, %arg3: memref<1x128xf32, #tpu.memory_space<vmem>>, %arg4: memref<128x128xf32, #tpu.memory_space<vmem>>, %arg5: memref<1x128xf32, #tpu.memory_space<vmem>>, %arg6: memref<8x128xf32, #tpu.memory_space<vmem>>) attributes {dimension_semantics = [#tpu.dimension_semantics<parallel>], iteration_bounds = array<i64: 1>, scalar_prefetch = 0 : i64, scratch_operands = 0 : i64, tpu.core_type = #tpu.core_type<tc>, window_params = [{transform_indices = @transform_0, window_bounds = array<i64: 64, 32>}, {pipeline_mode = #tpu.pipeline_mode<synchronous>, transform_indices = @transform_1, window_bounds = array<i64: 32, 128>}, {pipeline_mode = #tpu.pipeline_mode<synchronous>, transform_indices = @transform_2, window_bounds = array<i64: 1, 128>}, {pipeline_mode = #tpu.pipeline_mode<synchronous>, transform_indices = @transform_3, window_bounds = array<i64: 128, 128>}, {pipeline_mode = #tpu.pipeline_mode<synchronous>, transform_indices = @transform_4, window_bounds = array<i64: 1, 128>}, {transform_indices = @transform_5, window_bounds = array<i64: 8, 128>}]} {
    %c0 = arith.constant 0 : index
    %c0_0 = arith.constant 0 : index
    %0 = vector.load %arg1[%c0, %c0_0] : memref<64x32xf32, #tpu.memory_space<vmem>>, vector<64x32xf32>
    %c0_1 = arith.constant 0 : index
    %c0_2 = arith.constant 0 : index
    %1 = vector.load %arg2[%c0_1, %c0_2] : memref<32x128xf32, #tpu.memory_space<vmem>>, vector<32x128xf32>
    %cst = arith.constant dense<0.000000e+00> : vector<64x128xf32>
    %2 = tpu.matmul %0, %1, %cst {dimension_numbers = #tpu.dot_dimension_numbers<[1], [0], [0], [1], [0, 0, 1, 1], [], []>} : vector<64x32xf32>, vector<32x128xf32>, vector<64x128xf32> -> vector<64x128xf32>
    %c0_3 = arith.constant 0 : index
    %c0_4 = arith.constant 0 : index
    %3 = vector.load %arg3[%c0_3, %c0_4] : memref<1x128xf32, #tpu.memory_space<vmem>>, vector<1x128xf32>
    %4 = vector.broadcast %3 : vector<1x128xf32> to vector<64x128xf32>
    %5 = arith.addf %2, %4 : vector<64x128xf32>
    %6 = vector.shape_cast %5 : vector<64x128xf32> to vector<8x8x128xf32>
    %cst_5 = arith.constant 0.000000e+00 : f32
    %7 = vector.broadcast %cst_5 : f32 to vector<8x128xf32>
    %cst_6 = arith.constant 0.000000e+00 : f32
    %8 = vector.broadcast %cst_6 : f32 to vector<8x128xf32>
    %cst_7 = arith.constant 0.899999976 : f32
    %9 = vector.broadcast %cst_7 : f32 to vector<8x128xf32>
    %10 = arith.mulf %9, %7 : vector<8x128xf32>
    %11 = vector.extract_strided_slice %6 {offsets = [0, 0, 0], sizes = [8, 1, 128], strides = [1, 1, 1]} : vector<8x8x128xf32> to vector<8x1x128xf32>
    %12 = vector.shape_cast %11 : vector<8x1x128xf32> to vector<8x128xf32>
    %13 = arith.addf %10, %12 : vector<8x128xf32>
    %cst_8 = arith.constant 7.500000e-01 : f32
    %14 = vector.broadcast %cst_8 : f32 to vector<8x128xf32>
    %15 = arith.cmpf ogt, %13, %14 : vector<8x128xf32>
    %16 = arith.extui %15 : vector<8x128xi1> to vector<8x128xi32>
    %17 = arith.sitofp %16 : vector<8x128xi32> to vector<8x128xf32>
    %18 = arith.addf %8, %17 : vector<8x128xf32>
    %cst_9 = arith.constant 7.500000e-01 : f32
    %19 = vector.broadcast %cst_9 : f32 to vector<8x128xf32>
    %20 = arith.subf %13, %19 : vector<8x128xf32>
    %21 = arith.select %15, %20, %13 : vector<8x128xi1>, vector<8x128xf32>
    %cst_10 = arith.constant 0.899999976 : f32
    %22 = vector.broadcast %cst_10 : f32 to vector<8x128xf32>
    %23 = arith.mulf %22, %21 : vector<8x128xf32>
    %24 = vector.extract_strided_slice %6 {offsets = [0, 1, 0], sizes = [8, 1, 128], strides = [1, 1, 1]} : vector<8x8x128xf32> to vector<8x1x128xf32>
    %25 = vector.shape_cast %24 : vector<8x1x128xf32> to vector<8x128xf32>
    %26 = arith.addf %23, %25 : vector<8x128xf32>
    %cst_11 = arith.constant 7.500000e-01 : f32
    %27 = vector.broadcast %cst_11 : f32 to vector<8x128xf32>
    %28 = arith.cmpf ogt, %26, %27 : vector<8x128xf32>
    %29 = arith.extui %28 : vector<8x128xi1> to vector<8x128xi32>
    %30 = arith.sitofp %29 : vector<8x128xi32> to vector<8x128xf32>
    %31 = arith.addf %18, %30 : vector<8x128xf32>
    %cst_12 = arith.constant 7.500000e-01 : f32
    %32 = vector.broadcast %cst_12 : f32 to vector<8x128xf32>
    %33 = arith.subf %26, %32 : vector<8x128xf32>
    %34 = arith.select %28, %33, %26 : vector<8x128xi1>, vector<8x128xf32>
    %cst_13 = arith.constant 0.899999976 : f32
    %35 = vector.broadcast %cst_13 : f32 to vector<8x128xf32>
    %36 = arith.mulf %35, %34 : vector<8x128xf32>
    %37 = vector.extract_strided_slice %6 {offsets = [0, 2, 0], sizes = [8, 1, 128], strides = [1, 1, 1]} : vector<8x8x128xf32> to vector<8x1x128xf32>
    %38 = vector.shape_cast %37 : vector<8x1x128xf32> to vector<8x128xf32>
    %39 = arith.addf %36, %38 : vector<8x128xf32>
    %cst_14 = arith.constant 7.500000e-01 : f32
    %40 = vector.broadcast %cst_14 : f32 to vector<8x128xf32>
    %41 = arith.cmpf ogt, %39, %40 : vector<8x128xf32>
    %42 = arith.extui %41 : vector<8x128xi1> to vector<8x128xi32>
    %43 = arith.sitofp %42 : vector<8x128xi32> to vector<8x128xf32>
    %44 = arith.addf %31, %43 : vector<8x128xf32>
    %cst_15 = arith.constant 7.500000e-01 : f32
    %45 = vector.broadcast %cst_15 : f32 to vector<8x128xf32>
    %46 = arith.subf %39, %45 : vector<8x128xf32>
    %47 = arith.select %41, %46, %39 : vector<8x128xi1>, vector<8x128xf32>
    %cst_16 = arith.constant 0.899999976 : f32
    %48 = vector.broadcast %cst_16 : f32 to vector<8x128xf32>
    %49 = arith.mulf %48, %47 : vector<8x128xf32>
    %50 = vector.extract_strided_slice %6 {offsets = [0, 3, 0], sizes = [8, 1, 128], strides = [1, 1, 1]} : vector<8x8x128xf32> to vector<8x1x128xf32>
    %51 = vector.shape_cast %50 : vector<8x1x128xf32> to vector<8x128xf32>
    %52 = arith.addf %49, %51 : vector<8x128xf32>
    %cst_17 = arith.constant 7.500000e-01 : f32
    %53 = vector.broadcast %cst_17 : f32 to vector<8x128xf32>
    %54 = arith.cmpf ogt, %52, %53 : vector<8x128xf32>
    %55 = arith.extui %54 : vector<8x128xi1> to vector<8x128xi32>
    %56 = arith.sitofp %55 : vector<8x128xi32> to vector<8x128xf32>
    %57 = arith.addf %44, %56 : vector<8x128xf32>
    %cst_18 = arith.constant 7.500000e-01 : f32
    %58 = vector.broadcast %cst_18 : f32 to vector<8x128xf32>
    %59 = arith.subf %52, %58 : vector<8x128xf32>
    %60 = arith.select %54, %59, %52 : vector<8x128xi1>, vector<8x128xf32>
    %cst_19 = arith.constant 0.899999976 : f32
    %61 = vector.broadcast %cst_19 : f32 to vector<8x128xf32>
    %62 = arith.mulf %61, %60 : vector<8x128xf32>
    %63 = vector.extract_strided_slice %6 {offsets = [0, 4, 0], sizes = [8, 1, 128], strides = [1, 1, 1]} : vector<8x8x128xf32> to vector<8x1x128xf32>
    %64 = vector.shape_cast %63 : vector<8x1x128xf32> to vector<8x128xf32>
    %65 = arith.addf %62, %64 : vector<8x128xf32>
    %cst_20 = arith.constant 7.500000e-01 : f32
    %66 = vector.broadcast %cst_20 : f32 to vector<8x128xf32>
    %67 = arith.cmpf ogt, %65, %66 : vector<8x128xf32>
    %68 = arith.extui %67 : vector<8x128xi1> to vector<8x128xi32>
    %69 = arith.sitofp %68 : vector<8x128xi32> to vector<8x128xf32>
    %70 = arith.addf %57, %69 : vector<8x128xf32>
    %cst_21 = arith.constant 7.500000e-01 : f32
    %71 = vector.broadcast %cst_21 : f32 to vector<8x128xf32>
    %72 = arith.subf %65, %71 : vector<8x128xf32>
    %73 = arith.select %67, %72, %65 : vector<8x128xi1>, vector<8x128xf32>
    %cst_22 = arith.constant 0.899999976 : f32
    %74 = vector.broadcast %cst_22 : f32 to vector<8x128xf32>
    %75 = arith.mulf %74, %73 : vector<8x128xf32>
    %76 = vector.extract_strided_slice %6 {offsets = [0, 5, 0], sizes = [8, 1, 128], strides = [1, 1, 1]} : vector<8x8x128xf32> to vector<8x1x128xf32>
    %77 = vector.shape_cast %76 : vector<8x1x128xf32> to vector<8x128xf32>
    %78 = arith.addf %75, %77 : vector<8x128xf32>
    %cst_23 = arith.constant 7.500000e-01 : f32
    %79 = vector.broadcast %cst_23 : f32 to vector<8x128xf32>
    %80 = arith.cmpf ogt, %78, %79 : vector<8x128xf32>
    %81 = arith.extui %80 : vector<8x128xi1> to vector<8x128xi32>
    %82 = arith.sitofp %81 : vector<8x128xi32> to vector<8x128xf32>
    %83 = arith.addf %70, %82 : vector<8x128xf32>
    %cst_24 = arith.constant 7.500000e-01 : f32
    %84 = vector.broadcast %cst_24 : f32 to vector<8x128xf32>
    %85 = arith.subf %78, %84 : vector<8x128xf32>
    %86 = arith.select %80, %85, %78 : vector<8x128xi1>, vector<8x128xf32>
    %cst_25 = arith.constant 0.899999976 : f32
    %87 = vector.broadcast %cst_25 : f32 to vector<8x128xf32>
    %88 = arith.mulf %87, %86 : vector<8x128xf32>
    %89 = vector.extract_strided_slice %6 {offsets = [0, 6, 0], sizes = [8, 1, 128], strides = [1, 1, 1]} : vector<8x8x128xf32> to vector<8x1x128xf32>
    %90 = vector.shape_cast %89 : vector<8x1x128xf32> to vector<8x128xf32>
    %91 = arith.addf %88, %90 : vector<8x128xf32>
    %cst_26 = arith.constant 7.500000e-01 : f32
    %92 = vector.broadcast %cst_26 : f32 to vector<8x128xf32>
    %93 = arith.cmpf ogt, %91, %92 : vector<8x128xf32>
    %94 = arith.extui %93 : vector<8x128xi1> to vector<8x128xi32>
    %95 = arith.sitofp %94 : vector<8x128xi32> to vector<8x128xf32>
    %96 = arith.addf %83, %95 : vector<8x128xf32>
    %cst_27 = arith.constant 7.500000e-01 : f32
    %97 = vector.broadcast %cst_27 : f32 to vector<8x128xf32>
    %98 = arith.subf %91, %97 : vector<8x128xf32>
    %99 = arith.select %93, %98, %91 : vector<8x128xi1>, vector<8x128xf32>
    %cst_28 = arith.constant 0.899999976 : f32
    %100 = vector.broadcast %cst_28 : f32 to vector<8x128xf32>
    %101 = arith.mulf %100, %99 : vector<8x128xf32>
    %102 = vector.extract_strided_slice %6 {offsets = [0, 7, 0], sizes = [8, 1, 128], strides = [1, 1, 1]} : vector<8x8x128xf32> to vector<8x1x128xf32>
    %103 = vector.shape_cast %102 : vector<8x1x128xf32> to vector<8x128xf32>
    %104 = arith.addf %101, %103 : vector<8x128xf32>
    %cst_29 = arith.constant 7.500000e-01 : f32
    %105 = vector.broadcast %cst_29 : f32 to vector<8x128xf32>
    %106 = arith.cmpf ogt, %104, %105 : vector<8x128xf32>
    %107 = arith.extui %106 : vector<8x128xi1> to vector<8x128xi32>
    %108 = arith.sitofp %107 : vector<8x128xi32> to vector<8x128xf32>
    %109 = arith.addf %96, %108 : vector<8x128xf32>
    %c0_30 = arith.constant 0 : index
    %c0_31 = arith.constant 0 : index
    %110 = vector.load %arg4[%c0_30, %c0_31] : memref<128x128xf32, #tpu.memory_space<vmem>>, vector<128x128xf32>
    %cst_32 = arith.constant dense<0.000000e+00> : vector<8x128xf32>
    %111 = tpu.matmul %109, %110, %cst_32 {dimension_numbers = #tpu.dot_dimension_numbers<[1], [0], [0], [1], [0, 0, 1, 1], [], []>} : vector<8x128xf32>, vector<128x128xf32>, vector<8x128xf32> -> vector<8x128xf32>
    %c0_33 = arith.constant 0 : index
    %c0_34 = arith.constant 0 : index
    %112 = vector.load %arg5[%c0_33, %c0_34] : memref<1x128xf32, #tpu.memory_space<vmem>>, vector<1x128xf32>
    %113 = vector.broadcast %112 : vector<1x128xf32> to vector<8x128xf32>
    %114 = arith.addf %111, %113 : vector<8x128xf32>
    %cst_35 = arith.constant dense<0xFF800000> : vector<8xf32>
    %115 = vector.multi_reduction <maximumf>, %114, %cst_35 [1] : vector<8x128xf32> to vector<8xf32>
    %116 = vector.shape_cast %115 : vector<8xf32> to vector<8x1xf32>
    %117 = vector.broadcast %116 : vector<8x1xf32> to vector<8x128xf32>
    %118 = arith.subf %114, %117 : vector<8x128xf32>
    %119 = math.exp %118 : vector<8x128xf32>
    %cst_36 = arith.constant dense<0.000000e+00> : vector<8xf32>
    %120 = vector.multi_reduction <add>, %119, %cst_36 [1] : vector<8x128xf32> to vector<8xf32>
    %121 = vector.shape_cast %120 : vector<8xf32> to vector<8x1xf32>
    %122 = math.log %121 : vector<8x1xf32>
    %123 = arith.addf %116, %122 : vector<8x1xf32>
    %124 = vector.broadcast %123 : vector<8x1xf32> to vector<8x128xf32>
    %125 = arith.subf %114, %124 : vector<8x128xf32>
    %c0_37 = arith.constant 0 : index
    %c0_38 = arith.constant 0 : index
    %126 = vector.load %arg6[%c0_37, %c0_38] : memref<8x128xf32, #tpu.memory_space<vmem>>, vector<8x128xf32>
    tpu.vector_store %arg6[%c0_37, %c0_38], %125 {strides = array<i32>} : memref<8x128xf32, #tpu.memory_space<vmem>>, vector<8x128xf32>,
    return
  }
  func.func @transform_0(%arg0: i32) -> (i32, i32) {
    %c0_i32 = arith.constant 0 : i32
    %c0_i32_0 = arith.constant 0 : i32
    return %arg0, %c0_i32 : i32, i32
  }
  func.func @transform_1(%arg0: i32) -> (i32, i32) {
    %c0_i32 = arith.constant 0 : i32
    %c0_i32_0 = arith.constant 0 : i32
    %c0_i32_1 = arith.constant 0 : i32
    return %c0_i32, %c0_i32_0 : i32, i32
  }
  func.func @transform_2(%arg0: i32) -> (i32, i32) {
    %c0_i32 = arith.constant 0 : i32
    %c0_i32_0 = arith.constant 0 : i32
    %c0_i32_1 = arith.constant 0 : i32
    return %c0_i32, %c0_i32_0 : i32, i32
  }
  func.func @transform_3(%arg0: i32) -> (i32, i32) {
    %c0_i32 = arith.constant 0 : i32
    %c0_i32_0 = arith.constant 0 : i32
    %c0_i32_1 = arith.constant 0 : i32
    return %c0_i32, %c0_i32_0 : i32, i32
  }
  func.func @transform_4(%arg0: i32) -> (i32, i32) {
    %c0_i32 = arith.constant 0 : i32
    %c0_i32_0 = arith.constant 0 : i32
    %c0_i32_1 = arith.constant 0 : i32
    return %c0_i32, %c0_i32_0 : i32, i32
  }
  func.func @transform_5(%arg0: i32) -> (i32, i32) {
    %c0_i32 = arith.constant 0 : i32
    %c0_i32_0 = arith.constant 0 : i32
    return %arg0, %c0_i32 : i32, i32
  }
}

</mosaic_0001>

<llo_original>
// kernel: tpu_custom_call.1
$region0: #{tpu_custom_call.1}
  #allocation0 [shape = 'u32[]', space=smem, size = 0x4, offset = 0x4, fixed_abs, tag = 'smem constant byte address 0x4 - core index']
  #allocation1 [shape = 'u32[144,128]{1,0:T(1,128)}', space=vmem, size = 0x12000, scoped, tag = 'internal scratch']
  %s0 = inlined_call_operand.vmem [shape: f32[64,32], index: 0, kind: input, shape index: {}]
  %s1 = inlined_call_operand.vmem [shape: f32[32,128], index: 1, kind: input, shape index: {}]
  %s2 = inlined_call_operand.vmem [shape: f32[1,128], index: 2, kind: input, shape index: {}]
  %s3 = inlined_call_operand.hbm [shape: f32[128,128], index: 3, kind: input, shape index: {}]
  %s4 = inlined_call_operand.vmem [shape: f32[1,128], index: 4, kind: input, shape index: {}]
  %s5 = inlined_call_operand.hbm [shape: f32[8,128], index: 5, kind: output, shape index: {}]
  %s6 = sld [smem:[#allocation0]]
  $region34: #{tpu_custom_call.1} parent=0
    _
  %s8 = ssub.s32 1, %s6
  %s9 = scalar_select 0, %s8, %s6
  $region1: #{tpu_custom_call.1} parent=0
    #allocation2 [shape = 'u8[65536]{0}', space=vmem, size = 0x10000, scoped, tag = 'input window, operand 3, single buffered']
    #allocation3 [shape = 's32[1]{0}', space=sflag, size = 0x4, scoped, tag = 'scoped memory for tpu_custom_call.1']
    #allocation4 [shape = 's32[1]{0}', space=sflag, size = 0x4, scoped, tag = 'scoped memory for tpu_custom_call.1']
    #allocation5 [shape = 'u8[4096]{0}', space=vmem, size = 0x1000, scoped, tag = 'output window, operand 0, single buffered']
    %10 = vsyncpa [#allocation3], 0
    %11 = vsyncpa [#allocation4], 0
    // Predicated region
    $region2: #{tpu_custom_call.1} parent=1 // pred_check
      _
    $region3: #{tpu_custom_call.1} parent=1 // pred_check_branch
      %13 = sbr.rel (0) target = $region5
    $region4: #{tpu_custom_call.1} parent=1 // pred_region
      _
    $region5: #{tpu_custom_call.1} parent=1 // pred_fallthru
      _
    // Predicated region
    $region6: #{tpu_custom_call.1} parent=1 // pred_check
      _
    $region7: #{tpu_custom_call.1} parent=1 // pred_check_branch
      %15 = sbr.rel (0) target = $region9
    $region8: #{tpu_custom_call.1} parent=1 // pred_region
      _
    $region9: #{tpu_custom_call.1} parent=1 // pred_fallthru
      _
    // Predicated region
    $region10: #{tpu_custom_call.1} parent=1 // pred_check
      _
    $region11: #{tpu_custom_call.1} parent=1 // pred_check_branch
      %17 = sbr.rel (0) target = $region13
    $region12: #{tpu_custom_call.1} parent=1 // pred_region
      _
    $region13: #{tpu_custom_call.1} parent=1 // pred_fallthru
      _
    // Predicated region
    $region14: #{tpu_custom_call.1} parent=1 // pred_check
      _
    $region15: #{tpu_custom_call.1} parent=1 // pred_check_branch
      %19 = sbr.rel (0) target = $region17
    $region16: #{tpu_custom_call.1} parent=1 // pred_region
      %s21 = ssub.s32 2048, 2048
      %22 = vsyncadd [#allocation3], %s21
      %s23 = sshll.u32 [#allocation2], 4
      %s24 = int_to_ptr.vmem [resolvable:$true] %s23
      %29 = dma.hbm_to_vmem [thread:$0]  %s3, 2048, %s24, [#allocation3], 128, 128, 8
    $region17: #{tpu_custom_call.1} parent=1 // pred_fallthru
      _
    // Predicated region
    $region18: #{tpu_custom_call.1} parent=1 // pred_check
      _
    $region19: #{tpu_custom_call.1} parent=1 // pred_check_branch
      %31 = sbr.rel (0) target = $region21
    $region20: #{tpu_custom_call.1} parent=1 // pred_region
      _
    $region21: #{tpu_custom_call.1} parent=1 // pred_fallthru
      _
    // Predicated region
    $region22: #{tpu_custom_call.1} parent=1 // pred_check
      _
    $region23: #{tpu_custom_call.1} parent=1 // pred_check_branch
      %33 = sbr.rel (0) target = $region25
    $region24: #{tpu_custom_call.1} parent=1 // pred_region
      %34 = dma.done [#allocation3], 2048
    $region25: #{tpu_custom_call.1} parent=1 // pred_fallthru
      _
    %v35 = vld [vmem:[%s0] sm:$0xff]
    %v36 = vld [vmem:[%s0 + $0x8] sm:$0xff]
    %v37 = vld [vmem:[%s0 + $0x10] sm:$0xff]
    %v38 = vld [vmem:[%s0 + $0x18] sm:$0xff]
    %v39 = vld [vmem:[%s0 + $0x20] sm:$0xff]
    %v40 = vld [vmem:[%s0 + $0x28] sm:$0xff]
    %v41 = vld [vmem:[%s0 + $0x30] sm:$0xff]
    %v42 = vld [vmem:[%s0 + $0x38] sm:$0xff]
    %v43 = vld [vmem:[%s1] sm:$0xff]
    %v44 = vld [vmem:[%s1 + $0x8] sm:$0xff]
    %v45 = vld [vmem:[%s1 + $0x10] sm:$0xff]
    %v46 = vld [vmem:[%s1 + $0x18] sm:$0xff]
    %v47 = vld [vmem:[%s2] sm:$0x1]
    %v49 = vlaneseq
    %v50 = vshrl.u32 %v49, 7
    %v51 = vsub.s32 0, %v50
    %v52 = vrot.slane %v47, %v51
    %vm54 = vcmask 261120
    %v56 = vsel %vm54, %v35, 0
    %v59 = vsel %vm54, %v36, 0
    %v62 = vsel %vm54, %v37, 0
    %v65 = vsel %vm54, %v38, 0
    %v68 = vsel %vm54, %v39, 0
    %v71 = vsel %vm54, %v40, 0
    %v74 = vsel %vm54, %v41, 0
    %v77 = vsel %vm54, %v42, 0
    %79 = vmatprep.subr.mxu0 0.0
    %80 = vmatpush1.msra.mxu0 %v43
    %81 = vmatprep.subr.mxu0 0.0
    %82 = vmatpush1.msra.mxu0 %v44
    %83 = vmatprep.subr.mxu0 0.0
    %84 = vmatpush1.msra.mxu0 %v45
    %85 = vmatprep.subr.mxu0 0.0
    %86 = vmatpush1.msra.mxu0 %v46
    %87 = vmatprep.subr.mxu0 0.0
    %88 = vmatpush1.msra.mxu0 0.0
    %89 = vmatprep.subr.mxu0 0.0
    %90 = vmatpush1.msra.mxu0 0.0
    %91 = vmatprep.subr.mxu0 0.0
    %92 = vmatpush1.msra.mxu0 0.0
    %93 = vmatprep.subr.mxu0 0.0
    %94 = vmatpush1.msra.mxu0 0.0
    %95 = vmatprep.subr.mxu0 0.0
    %96 = vmatpush1.msra.mxu0 0.0
    %97 = vmatprep.subr.mxu0 0.0
    %98 = vmatpush1.msra.mxu0 0.0
    %99 = vmatprep.subr.mxu0 0.0
    %100 = vmatpush1.msra.mxu0 0.0
    %101 = vmatprep.subr.mxu0 0.0
    %102 = vmatpush1.msra.mxu0 0.0
    %103 = vmatprep.subr.mxu0 0.0
    %104 = vmatpush1.msra.mxu0 0.0
    %105 = vmatprep.subr.mxu0 0.0
    %106 = vmatpush1.msra.mxu0 0.0
    %107 = vmatprep.subr.mxu0 0.0
    %108 = vmatpush1.msra.mxu0 0.0
    %109 = vmatprep.subr.mxu0 0.0
    %110 = vmatpush1.msra.mxu0 0.0
    %111 = vmatprep.subr.mxu0 0.0
    %112 = vmatpush1.msra.mxu0 0.0
    %113 = vmatprep.subr.mxu0 0.0
    %114 = vmatpush1.msra.mxu0 0.0
    %115 = vmatprep.subr.mxu0 0.0
    %116 = vmatpush1.msra.mxu0 0.0
    %117 = vmatprep.subr.mxu0 0.0
    %118 = vmatpush1.msra.mxu0 0.0
    %119 = vmatprep.subr.mxu0 0.0
    %120 = vmatpush1.msra.mxu0 0.0
    %121 = vmatprep.subr.mxu0 0.0
    %122 = vmatpush1.msra.mxu0 0.0
    %123 = vmatprep.subr.mxu0 0.0
    %124 = vmatpush1.msra.mxu0 0.0
    %125 = vmatprep.subr.mxu0 0.0
    %126 = vmatpush1.msra.mxu0 0.0
    %127 = vmatprep.subr.mxu0 0.0
    %128 = vmatpush1.msra.mxu0 0.0
    %129 = vmatprep.subr.mxu0 0.0
    %130 = vmatpush1.msra.mxu0 0.0
    %131 = vmatprep.subr.mxu0 0.0
    %132 = vmatpush1.msra.mxu0 0.0
    %133 = vmatprep.subr.mxu0 0.0
    %134 = vmatpush1.msra.mxu0 0.0
    %135 = vmatprep.subr.mxu0 0.0
    %136 = vmatpush1.msra.mxu0 0.0
    %137 = vmatprep.subr.mxu0 0.0
    %138 = vmatpush1.msra.mxu0 0.0
    %139 = vmatprep.subr.mxu0 0.0
    %140 = vmatpush1.msra.mxu0 0.0
    %141 = vmatprep.subr.mxu0 0.0
    %142 = vmatpush1.msra.mxu0 0.0
    %143 = vmatprep.mubr.f32.mxu0 0.0
    %144 = vmatmul.mubr.f32.gmra.mrb[0].mxu0 %v56
    %v145 = vpop.f32.mrb[0].mxu0
    %v146 = vadd.f32 %v52, %v145
    %v147 = vpop.f32.mrb[0].mxu0
    %148 = vmatprep.mubr.f32.mxu0 0.0
    %149 = vmatmul.mubr.f32.gmra.mrb[0].mxu0 %v59
    %v150 = vpop.f32.mrb[0].mxu0
    %v151 = vadd.f32 %v52, %v150
    %v152 = vpop.f32.mrb[0].mxu0
    %153 = vmatprep.mubr.f32.mxu0 0.0
    %154 = vmatmul.mubr.f32.gmra.mrb[0].mxu0 %v62
    %v155 = vpop.f32.mrb[0].mxu0
    %v156 = vadd.f32 %v52, %v155
    %v157 = vpop.f32.mrb[0].mxu0
    %158 = vmatprep.mubr.f32.mxu0 0.0
    %159 = vmatmul.mubr.f32.gmra.mrb[0].mxu0 %v65
    %v160 = vpop.f32.mrb[0].mxu0
    %v161 = vadd.f32 %v52, %v160
    %v162 = vpop.f32.mrb[0].mxu0
    %163 = vmatprep.mubr.f32.mxu0 0.0
    %164 = vmatmul.mubr.f32.gmra.mrb[0].mxu0 %v68
    %v165 = vpop.f32.mrb[0].mxu0
    %v166 = vadd.f32 %v52, %v165
    %v167 = vpop.f32.mrb[0].mxu0
    %168 = vmatprep.mubr.f32.mxu0 0.0
    %169 = vmatmul.mubr.f32.gmra.mrb[0].mxu0 %v71
    %v170 = vpop.f32.mrb[0].mxu0
    %v171 = vadd.f32 %v52, %v170
    %v172 = vpop.f32.mrb[0].mxu0
    %173 = vmatprep.mubr.f32.mxu0 0.0
    %174 = vmatmul.mubr.f32.gmra.mrb[0].mxu0 %v74
    %v175 = vpop.f32.mrb[0].mxu0
    %v176 = vadd.f32 %v52, %v175
    %v177 = vpop.f32.mrb[0].mxu0
    %178 = vmatprep.mubr.f32.mxu0 0.0
    %179 = vmatmul.mubr.f32.gmra.mrb[0].mxu0 %v77
    %v180 = vpop.f32.mrb[0].mxu0
    %v181 = vadd.f32 %v52, %v180
    %v182 = vpop.f32.mrb[0].mxu0
    %183 = vdwg.mxu0
    %v184 = vadd.f32 %v146, 0.0
    %v185 = vadd.f32 %v151, 0.0
    %v186 = vadd.f32 %v156, 0.0
    %v187 = vadd.f32 %v161, 0.0
    %v188 = vadd.f32 %v166, 0.0
    %v189 = vadd.f32 %v171, 0.0
    %v190 = vadd.f32 %v176, 0.0
    %v191 = vadd.f32 %v181, 0.0
    %vm192 = vcmp.gt.f32.partialorder %v184, 0.75
    %vm193 = vcmp.gt.f32.partialorder %v185, 0.75
    %vm194 = vcmp.gt.f32.partialorder %v186, 0.75
    %vm195 = vcmp.gt.f32.partialorder %v187, 0.75
    %vm196 = vcmp.gt.f32.partialorder %v188, 0.75
    %vm197 = vcmp.gt.f32.partialorder %v189, 0.75
    %vm198 = vcmp.gt.f32.partialorder %v190, 0.75
    %vm199 = vcmp.gt.f32.partialorder %v191, 0.75
    %v200 = vsel %vm192, 1, 0
    %v201 = vsel %vm193, 1, 0
    %v202 = vsel %vm194, 1, 0
    %v203 = vsel %vm195, 1, 0
    %v204 = vsel %vm196, 1, 0
    %v205 = vsel %vm197, 1, 0
    %v206 = vsel %vm198, 1, 0
    %v207 = vsel %vm199, 1, 0
    %v208 = vcvt.s32.f32 %v200
    %v209 = vcvt.s32.f32 %v201
    %v210 = vcvt.s32.f32 %v202
    %v211 = vcvt.s32.f32 %v203
    %v212 = vcvt.s32.f32 %v204
    %v213 = vcvt.s32.f32 %v205
    %v214 = vcvt.s32.f32 %v206
    %v215 = vcvt.s32.f32 %v207
    %v216 = vadd.f32 %v208, 0.0
    %v217 = vadd.f32 %v209, 0.0
    %v218 = vadd.f32 %v210, 0.0
    %v219 = vadd.f32 %v211, 0.0
    %v220 = vadd.f32 %v212, 0.0
    %v221 = vadd.f32 %v213, 0.0
    %v222 = vadd.f32 %v214, 0.0
    %v223 = vadd.f32 %v215, 0.0
    %v224 = vsub.f32 %v184, 0.75
    %v225 = vsub.f32 %v185, 0.75
    %v226 = vsub.f32 %v186, 0.75
    %v227 = vsub.f32 %v187, 0.75
    %v228 = vsub.f32 %v188, 0.75
    %v229 = vsub.f32 %v189, 0.75
    %v230 = vsub.f32 %v190, 0.75
    %v231 = vsub.f32 %v191, 0.75
    %v232 = vsel %vm192, %v224, %v184
    %v233 = vsel %vm193, %v225, %v185
    %v234 = vsel %vm194, %v226, %v186
    %v235 = vsel %vm195, %v227, %v187
    %v236 = vsel %vm196, %v228, %v188
    %v237 = vsel %vm197, %v229, %v189
    %v238 = vsel %vm198, %v230, %v190
    %v239 = vsel %vm199, %v231, %v191
    %v240 = vmul.f32 %v232, 0.9
    %v241 = vmul.f32 %v233, 0.9
    %v242 = vmul.f32 %v234, 0.9
    %v243 = vmul.f32 %v235, 0.9
    %v244 = vmul.f32 %v236, 0.9
    %v245 = vmul.f32 %v237, 0.9
    %v246 = vmul.f32 %v238, 0.9
    %v247 = vmul.f32 %v239, 0.9
    %v256 = vrot.slane %v146, 1
    %v257 = vrot.slane %v151, 1
    %v258 = vrot.slane %v156, 1
    %v259 = vrot.slane %v161, 1
    %v260 = vrot.slane %v166, 1
    %v261 = vrot.slane %v171, 1
    %v262 = vrot.slane %v176, 1
    %v263 = vrot.slane %v181, 1
    %v272 = vadd.f32 %v240, %v256
    %v273 = vadd.f32 %v241, %v257
    %v274 = vadd.f32 %v242, %v258
    %v275 = vadd.f32 %v243, %v259
    %v276 = vadd.f32 %v244, %v260
    %v277 = vadd.f32 %v245, %v261
    %v278 = vadd.f32 %v246, %v262
    %v279 = vadd.f32 %v247, %v263
    %vm280 = vcmp.gt.f32.partialorder %v272, 0.75
    %vm281 = vcmp.gt.f32.partialorder %v273, 0.75
    %vm282 = vcmp.gt.f32.partialorder %v274, 0.75
    %vm283 = vcmp.gt.f32.partialorder %v275, 0.75
    %vm284 = vcmp.gt.f32.partialorder %v276, 0.75
    %vm285 = vcmp.gt.f32.partialorder %v277, 0.75
    %vm286 = vcmp.gt.f32.partialorder %v278, 0.75
    %vm287 = vcmp.gt.f32.partialorder %v279, 0.75
    %v288 = vsel %vm280, 1, 0
    %v289 = vsel %vm281, 1, 0
    %v290 = vsel %vm282, 1, 0
    %v291 = vsel %vm283, 1, 0
    %v292 = vsel %vm284, 1, 0
    %v293 = vsel %vm285, 1, 0
    %v294 = vsel %vm286, 1, 0
    %v295 = vsel %vm287, 1, 0
    %v296 = vcvt.s32.f32 %v288
    %v297 = vcvt.s32.f32 %v289
    %v298 = vcvt.s32.f32 %v290
    %v299 = vcvt.s32.f32 %v291
    %v300 = vcvt.s32.f32 %v292
    %v301 = vcvt.s32.f32 %v293
    %v302 = vcvt.s32.f32 %v294
    %v303 = vcvt.s32.f32 %v295
    %v304 = vadd.f32 %v216, %v296
    %v305 = vadd.f32 %v217, %v297
    %v306 = vadd.f32 %v218, %v298
    %v307 = vadd.f32 %v219, %v299
    %v308 = vadd.f32 %v220, %v300
    %v309 = vadd.f32 %v221, %v301
    %v310 = vadd.f32 %v222, %v302
    %v311 = vadd.f32 %v223, %v303
    %v312 = vsub.f32 %v272, 0.75
    %v313 = vsub.f32 %v273, 0.75
    %v314 = vsub.f32 %v274, 0.75
    %v315 = vsub.f32 %v275, 0.75
    %v316 = vsub.f32 %v276, 0.75
    %v317 = vsub.f32 %v277, 0.75
    %v318 = vsub.f32 %v278, 0.75
    %v319 = vsub.f32 %v279, 0.75
    %v320 = vsel %vm280, %v312, %v272
    %v321 = vsel %vm281, %v313, %v273
    %v322 = vsel %vm282, %v314, %v274
    %v323 = vsel %vm283, %v315, %v275
    %v324 = vsel %vm284, %v316, %v276
    %v325 = vsel %vm285, %v317, %v277
    %v326 = vsel %vm286, %v318, %v278
    %v327 = vsel %vm287, %v319, %v279
    %v328 = vmul.f32 %v320, 0.9
    %v329 = vmul.f32 %v321, 0.9
    %v330 = vmul.f32 %v322, 0.9
    %v331 = vmul.f32 %v323, 0.9
    %v332 = vmul.f32 %v324, 0.9
    %v333 = vmul.f32 %v325, 0.9
    %v334 = vmul.f32 %v326, 0.9
    %v335 = vmul.f32 %v327, 0.9
    %v336 = vrot.slane %v146, 2
    %v337 = vrot.slane %v151, 2
    %v338 = vrot.slane %v156, 2
    %v339 = vrot.slane %v161, 2
    %v340 = vrot.slane %v166, 2
    %v341 = vrot.slane %v171, 2
    %v342 = vrot.slane %v176, 2
    %v343 = vrot.slane %v181, 2
    %v352 = vadd.f32 %v328, %v336
    %v353 = vadd.f32 %v329, %v337
    %v354 = vadd.f32 %v330, %v338
    %v355 = vadd.f32 %v331, %v339
    %v356 = vadd.f32 %v332, %v340
    %v357 = vadd.f32 %v333, %v341
    %v358 = vadd.f32 %v334, %v342
    %v359 = vadd.f32 %v335, %v343
    %vm360 = vcmp.gt.f32.partialorder %v352, 0.75
    %vm361 = vcmp.gt.f32.partialorder %v353, 0.75
    %vm362 = vcmp.gt.f32.partialorder %v354, 0.75
    %vm363 = vcmp.gt.f32.partialorder %v355, 0.75
    %vm364 = vcmp.gt.f32.partialorder %v356, 0.75
    %vm365 = vcmp.gt.f32.partialorder %v357, 0.75
    %vm366 = vcmp.gt.f32.partialorder %v358, 0.75
    %vm367 = vcmp.gt.f32.partialorder %v359, 0.75
    %v368 = vsel %vm360, 1, 0
    %v369 = vsel %vm361, 1, 0
    %v370 = vsel %vm362, 1, 0
    %v371 = vsel %vm363, 1, 0
    %v372 = vsel %vm364, 1, 0
    %v373 = vsel %vm365, 1, 0
    %v374 = vsel %vm366, 1, 0
    %v375 = vsel %vm367, 1, 0
    %v376 = vcvt.s32.f32 %v368
    %v377 = vcvt.s32.f32 %v369
    %v378 = vcvt.s32.f32 %v370
    %v379 = vcvt.s32.f32 %v371
    %v380 = vcvt.s32.f32 %v372
    %v381 = vcvt.s32.f32 %v373
    %v382 = vcvt.s32.f32 %v374
    %v383 = vcvt.s32.f32 %v375
    %v384 = vadd.f32 %v304, %v376
    %v385 = vadd.f32 %v305, %v377
    %v386 = vadd.f32 %v306, %v378
    %v387 = vadd.f32 %v307, %v379
    %v388 = vadd.f32 %v308, %v380
    %v389 = vadd.f32 %v309, %v381
    %v390 = vadd.f32 %v310, %v382
    %v391 = vadd.f32 %v311, %v383
    %v392 = vsub.f32 %v352, 0.75
    %v393 = vsub.f32 %v353, 0.75
    %v394 = vsub.f32 %v354, 0.75
    %v395 = vsub.f32 %v355, 0.75
    %v396 = vsub.f32 %v356, 0.75
    %v397 = vsub.f32 %v357, 0.75
    %v398 = vsub.f32 %v358, 0.75
    %v399 = vsub.f32 %v359, 0.75
    %v400 = vsel %vm360, %v392, %v352
    %v401 = vsel %vm361, %v393, %v353
    %v402 = vsel %vm362, %v394, %v354
    %v403 = vsel %vm363, %v395, %v355
    %v404 = vsel %vm364, %v396, %v356
    %v405 = vsel %vm365, %v397, %v357
    %v406 = vsel %vm366, %v398, %v358
    %v407 = vsel %vm367, %v399, %v359
    %v408 = vmul.f32 %v400, 0.9
    %v409 = vmul.f32 %v401, 0.9
    %v410 = vmul.f32 %v402, 0.9
    %v411 = vmul.f32 %v403, 0.9
    %v412 = vmul.f32 %v404, 0.9
    %v413 = vmul.f32 %v405, 0.9
    %v414 = vmul.f32 %v406, 0.9
    %v415 = vmul.f32 %v407, 0.9
    %v416 = vrot.slane %v146, 3
    %v417 = vrot.slane %v151, 3
    %v418 = vrot.slane %v156, 3
    %v419 = vrot.slane %v161, 3
    %v420 = vrot.slane %v166, 3
    %v421 = vrot.slane %v171, 3
    %v422 = vrot.slane %v176, 3
    %v423 = vrot.slane %v181, 3
    %v432 = vadd.f32 %v408, %v416
    %v433 = vadd.f32 %v409, %v417
    %v434 = vadd.f32 %v410, %v418
    %v435 = vadd.f32 %v411, %v419
    %v436 = vadd.f32 %v412, %v420
    %v437 = vadd.f32 %v413, %v421
    %v438 = vadd.f32 %v414, %v422
    %v439 = vadd.f32 %v415, %v423
    %vm440 = vcmp.gt.f32.partialorder %v432, 0.75
    %vm441 = vcmp.gt.f32.partialorder %v433, 0.75
    %vm442 = vcmp.gt.f32.partialorder %v434, 0.75
    %vm443 = vcmp.gt.f32.partialorder %v435, 0.75
    %vm444 = vcmp.gt.f32.partialorder %v436, 0.75
    %vm445 = vcmp.gt.f32.partialorder %v437, 0.75
    %vm446 = vcmp.gt.f32.partialorder %v438, 0.75
    %vm447 = vcmp.gt.f32.partialorder %v439, 0.75
    %v448 = vsel %vm440, 1, 0
    %v449 = vsel %vm441, 1, 0
    %v450 = vsel %vm442, 1, 0
    %v451 = vsel %vm443, 1, 0
    %v452 = vsel %vm444, 1, 0
    %v453 = vsel %vm445, 1, 0
    %v454 = vsel %vm446, 1, 0
    %v455 = vsel %vm447, 1, 0
    %v456 = vcvt.s32.f32 %v448
    %v457 = vcvt.s32.f32 %v449
    %v458 = vcvt.s32.f32 %v450
    %v459 = vcvt.s32.f32 %v451
    %v460 = vcvt.s32.f32 %v452
    %v461 = vcvt.s32.f32 %v453
    %v462 = vcvt.s32.f32 %v454
    %v463 = vcvt.s32.f32 %v455
    %v464 = vadd.f32 %v384, %v456
    %v465 = vadd.f32 %v385, %v457
    %v466 = vadd.f32 %v386, %v458
    %v467 = vadd.f32 %v387, %v459
    %v468 = vadd.f32 %v388, %v460
    %v469 = vadd.f32 %v389, %v461
    %v470 = vadd.f32 %v390, %v462
    %v471 = vadd.f32 %v391, %v463
    %v472 = vsub.f32 %v432, 0.75
    %v473 = vsub.f32 %v433, 0.75
    %v474 = vsub.f32 %v434, 0.75
    %v475 = vsub.f32 %v435, 0.75
    %v476 = vsub.f32 %v436, 0.75
    %v477 = vsub.f32 %v437, 0.75
    %v478 = vsub.f32 %v438, 0.75
    %v479 = vsub.f32 %v439, 0.75
    %v480 = vsel %vm440, %v472, %v432
    %v481 = vsel %vm441, %v473, %v433
    %v482 = vsel %vm442, %v474, %v434
    %v483 = vsel %vm443, %v475, %v435
    %v484 = vsel %vm444, %v476, %v436
    %v485 = vsel %vm445, %v477, %v437
    %v486 = vsel %vm446, %v478, %v438
    %v487 = vsel %vm447, %v479, %v439
    %v488 = vmul.f32 %v480, 0.9
    %v489 = vmul.f32 %v481, 0.9
    %v490 = vmul.f32 %v482, 0.9
    %v491 = vmul.f32 %v483, 0.9
    %v492 = vmul.f32 %v484, 0.9
    %v493 = vmul.f32 %v485, 0.9
    %v494 = vmul.f32 %v486, 0.9
    %v495 = vmul.f32 %v487, 0.9
    %v496 = vrot.slane %v146, 4
    %v497 = vrot.slane %v151, 4
    %v498 = vrot.slane %v156, 4
    %v499 = vrot.slane %v161, 4
    %v500 = vrot.slane %v166, 4
    %v501 = vrot.slane %v171, 4
    %v502 = vrot.slane %v176, 4
    %v503 = vrot.slane %v181, 4
    %v512 = vadd.f32 %v488, %v496
    %v513 = vadd.f32 %v489, %v497
    %v514 = vadd.f32 %v490, %v498
    %v515 = vadd.f32 %v491, %v499
    %v516 = vadd.f32 %v492, %v500
    %v517 = vadd.f32 %v493, %v501
    %v518 = vadd.f32 %v494, %v502
    %v519 = vadd.f32 %v495, %v503
    %vm520 = vcmp.gt.f32.partialorder %v512, 0.75
    %vm521 = vcmp.gt.f32.partialorder %v513, 0.75
    %vm522 = vcmp.gt.f32.partialorder %v514, 0.75
    %vm523 = vcmp.gt.f32.partialorder %v515, 0.75
    %vm524 = vcmp.gt.f32.partialorder %v516, 0.75
    %vm525 = vcmp.gt.f32.partialorder %v517, 0.75
    %vm526 = vcmp.gt.f32.partialorder %v518, 0.75
    %vm527 = vcmp.gt.f32.partialorder %v519, 0.75
    %v528 = vsel %vm520, 1, 0
    %v529 = vsel %vm521, 1, 0
    %v530 = vsel %vm522, 1, 0
    %v531 = vsel %vm523, 1, 0
    %v532 = vsel %vm524, 1, 0
    %v533 = vsel %vm525, 1, 0
    %v534 = vsel %vm526, 1, 0
    %v535 = vsel %vm527, 1, 0
    %v536 = vcvt.s32.f32 %v528
    %v537 = vcvt.s32.f32 %v529
    %v538 = vcvt.s32.f32 %v530
    %v539 = vcvt.s32.f32 %v531
    %v540 = vcvt.s32.f32 %v532
    %v541 = vcvt.s32.f32 %v533
    %v542 = vcvt.s32.f32 %v534
    %v543 = vcvt.s32.f32 %v535
    %v544 = vadd.f32 %v464, %v536
    %v545 = vadd.f32 %v465, %v537
    %v546 = vadd.f32 %v466, %v538
    %v547 = vadd.f32 %v467, %v539
    %v548 = vadd.f32 %v468, %v540
    %v549 = vadd.f32 %v469, %v541
    %v550 = vadd.f32 %v470, %v542
    %v551 = vadd.f32 %v471, %v543
    %v552 = vsub.f32 %v512, 0.75
    %v553 = vsub.f32 %v513, 0.75
    %v554 = vsub.f32 %v514, 0.75
    %v555 = vsub.f32 %v515, 0.75
    %v556 = vsub.f32 %v516, 0.75
    %v557 = vsub.f32 %v517, 0.75
    %v558 = vsub.f32 %v518, 0.75
    %v559 = vsub.f32 %v519, 0.75
    %v560 = vsel %vm520, %v552, %v512
    %v561 = vsel %vm521, %v553, %v513
    %v562 = vsel %vm522, %v554, %v514
    %v563 = vsel %vm523, %v555, %v515
    %v564 = vsel %vm524, %v556, %v516
    %v565 = vsel %vm525, %v557, %v517
    %v566 = vsel %vm526, %v558, %v518
    %v567 = vsel %vm527, %v559, %v519
    %v568 = vmul.f32 %v560, 0.9
    %v569 = vmul.f32 %v561, 0.9
    %v570 = vmul.f32 %v562, 0.9
    %v571 = vmul.f32 %v563, 0.9
    %v572 = vmul.f32 %v564, 0.9
    %v573 = vmul.f32 %v565, 0.9
    %v574 = vmul.f32 %v566, 0.9
    %v575 = vmul.f32 %v567, 0.9
    %v576 = vrot.slane %v146, 5
    %v577 = vrot.slane %v151, 5
    %v578 = vrot.slane %v156, 5
    %v579 = vrot.slane %v161, 5
    %v580 = vrot.slane %v166, 5
    %v581 = vrot.slane %v171, 5
    %v582 = vrot.slane %v176, 5
    %v583 = vrot.slane %v181, 5
    %v592 = vadd.f32 %v568, %v576
    %v593 = vadd.f32 %v569, %v577
    %v594 = vadd.f32 %v570, %v578
    %v595 = vadd.f32 %v571, %v579
    %v596 = vadd.f32 %v572, %v580
    %v597 = vadd.f32 %v573, %v581
    %v598 = vadd.f32 %v574, %v582
    %v599 = vadd.f32 %v575, %v583
    %vm600 = vcmp.gt.f32.partialorder %v592, 0.75
    %vm601 = vcmp.gt.f32.partialorder %v593, 0.75
    %vm602 = vcmp.gt.f32.partialorder %v594, 0.75
    %vm603 = vcmp.gt.f32.partialorder %v595, 0.75
    %vm604 = vcmp.gt.f32.partialorder %v596, 0.75
    %vm605 = vcmp.gt.f32.partialorder %v597, 0.75
    %vm606 = vcmp.gt.f32.partialorder %v598, 0.75
    %vm607 = vcmp.gt.f32.partialorder %v599, 0.75
    %v608 = vsel %vm600, 1, 0
    %v609 = vsel %vm601, 1, 0
    %v610 = vsel %vm602, 1, 0
    %v611 = vsel %vm603, 1, 0
    %v612 = vsel %vm604, 1, 0
    %v613 = vsel %vm605, 1, 0
    %v614 = vsel %vm606, 1, 0
    %v615 = vsel %vm607, 1, 0
    %v616 = vcvt.s32.f32 %v608
    %v617 = vcvt.s32.f32 %v609
    %v618 = vcvt.s32.f32 %v610
    %v619 = vcvt.s32.f32 %v611
    %v620 = vcvt.s32.f32 %v612
    %v621 = vcvt.s32.f32 %v613
    %v622 = vcvt.s32.f32 %v614
    %v623 = vcvt.s32.f32 %v615
    %v624 = vadd.f32 %v544, %v616
    %v625 = vadd.f32 %v545, %v617
    %v626 = vadd.f32 %v546, %v618
    %v627 = vadd.f32 %v547, %v619
    %v628 = vadd.f32 %v548, %v620
    %v629 = vadd.f32 %v549, %v621
    %v630 = vadd.f32 %v550, %v622
    %v631 = vadd.f32 %v551, %v623
    %v632 = vsub.f32 %v592, 0.75
    %v633 = vsub.f32 %v593, 0.75
    %v634 = vsub.f32 %v594, 0.75
    %v635 = vsub.f32 %v595, 0.75
    %v636 = vsub.f32 %v596, 0.75
    %v637 = vsub.f32 %v597, 0.75
    %v638 = vsub.f32 %v598, 0.75
    %v639 = vsub.f32 %v599, 0.75
    %v640 = vsel %vm600, %v632, %v592
    %v641 = vsel %vm601, %v633, %v593
    %v642 = vsel %vm602, %v634, %v594
    %v643 = vsel %vm603, %v635, %v595
    %v644 = vsel %vm604, %v636, %v596
    %v645 = vsel %vm605, %v637, %v597
    %v646 = vsel %vm606, %v638, %v598
    %v647 = vsel %vm607, %v639, %v599
    %v648 = vmul.f32 %v640, 0.9
    %v649 = vmul.f32 %v641, 0.9
    %v650 = vmul.f32 %v642, 0.9
    %v651 = vmul.f32 %v643, 0.9
    %v652 = vmul.f32 %v644, 0.9
    %v653 = vmul.f32 %v645, 0.9
    %v654 = vmul.f32 %v646, 0.9
    %v655 = vmul.f32 %v647, 0.9
    %v656 = vrot.slane %v146, 6
    %v657 = vrot.slane %v151, 6
    %v658 = vrot.slane %v156, 6
    %v659 = vrot.slane %v161, 6
    %v660 = vrot.slane %v166, 6
    %v661 = vrot.slane %v171, 6
    %v662 = vrot.slane %v176, 6
    %v663 = vrot.slane %v181, 6
    %v672 = vadd.f32 %v648, %v656
    %v673 = vadd.f32 %v649, %v657
    %v674 = vadd.f32 %v650, %v658
    %v675 = vadd.f32 %v651, %v659
    %v676 = vadd.f32 %v652, %v660
    %v677 = vadd.f32 %v653, %v661
    %v678 = vadd.f32 %v654, %v662
    %v679 = vadd.f32 %v655, %v663
    %vm680 = vcmp.gt.f32.partialorder %v672, 0.75
    %vm681 = vcmp.gt.f32.partialorder %v673, 0.75
    %vm682 = vcmp.gt.f32.partialorder %v674, 0.75
    %vm683 = vcmp.gt.f32.partialorder %v675, 0.75
    %vm684 = vcmp.gt.f32.partialorder %v676, 0.75
    %vm685 = vcmp.gt.f32.partialorder %v677, 0.75
    %vm686 = vcmp.gt.f32.partialorder %v678, 0.75
    %vm687 = vcmp.gt.f32.partialorder %v679, 0.75
    %v688 = vsel %vm680, 1, 0
    %v689 = vsel %vm681, 1, 0
    %v690 = vsel %vm682, 1, 0
    %v691 = vsel %vm683, 1, 0
    %v692 = vsel %vm684, 1, 0
    %v693 = vsel %vm685, 1, 0
    %v694 = vsel %vm686, 1, 0
    %v695 = vsel %vm687, 1, 0
    %v696 = vcvt.s32.f32 %v688
    %v697 = vcvt.s32.f32 %v689
    %v698 = vcvt.s32.f32 %v690
    %v699 = vcvt.s32.f32 %v691
    %v700 = vcvt.s32.f32 %v692
    %v701 = vcvt.s32.f32 %v693
    %v702 = vcvt.s32.f32 %v694
    %v703 = vcvt.s32.f32 %v695
    %v704 = vadd.f32 %v624, %v696
    %v705 = vadd.f32 %v625, %v697
    %v706 = vadd.f32 %v626, %v698
    %v707 = vadd.f32 %v627, %v699
    %v708 = vadd.f32 %v628, %v700
    %v709 = vadd.f32 %v629, %v701
    %v710 = vadd.f32 %v630, %v702
    %v711 = vadd.f32 %v631, %v703
    %v712 = vsub.f32 %v672, 0.75
    %v713 = vsub.f32 %v673, 0.75
    %v714 = vsub.f32 %v674, 0.75
    %v715 = vsub.f32 %v675, 0.75
    %v716 = vsub.f32 %v676, 0.75
    %v717 = vsub.f32 %v677, 0.75
    %v718 = vsub.f32 %v678, 0.75
    %v719 = vsub.f32 %v679, 0.75
    %v720 = vsel %vm680, %v712, %v672
    %v721 = vsel %vm681, %v713, %v673
    %v722 = vsel %vm682, %v714, %v674
    %v723 = vsel %vm683, %v715, %v675
    %v724 = vsel %vm684, %v716, %v676
    %v725 = vsel %vm685, %v717, %v677
    %v726 = vsel %vm686, %v718, %v678
    %v727 = vsel %vm687, %v719, %v679
    %v728 = vmul.f32 %v720, 0.9
    %v729 = vmul.f32 %v721, 0.9
    %v730 = vmul.f32 %v722, 0.9
    %v731 = vmul.f32 %v723, 0.9
    %v732 = vmul.f32 %v724, 0.9
    %v733 = vmul.f32 %v725, 0.9
    %v734 = vmul.f32 %v726, 0.9
    %v735 = vmul.f32 %v727, 0.9
    %v736 = vrot.slane %v146, 7
    %v737 = vrot.slane %v151, 7
    %v738 = vrot.slane %v156, 7
    %v739 = vrot.slane %v161, 7
    %v740 = vrot.slane %v166, 7
    %v741 = vrot.slane %v171, 7
    %v742 = vrot.slane %v176, 7
    %v743 = vrot.slane %v181, 7
    %v752 = vadd.f32 %v728, %v736
    %v753 = vadd.f32 %v729, %v737
    %v754 = vadd.f32 %v730, %v738
    %v755 = vadd.f32 %v731, %v739
    %v756 = vadd.f32 %v732, %v740
    %v757 = vadd.f32 %v733, %v741
    %v758 = vadd.f32 %v734, %v742
    %v759 = vadd.f32 %v735, %v743
    %vm760 = vcmp.gt.f32.partialorder %v752, 0.75
    %vm761 = vcmp.gt.f32.partialorder %v753, 0.75
    %vm762 = vcmp.gt.f32.partialorder %v754, 0.75
    %vm763 = vcmp.gt.f32.partialorder %v755, 0.75
    %vm764 = vcmp.gt.f32.partialorder %v756, 0.75
    %vm765 = vcmp.gt.f32.partialorder %v757, 0.75
    %vm766 = vcmp.gt.f32.partialorder %v758, 0.75
    %vm767 = vcmp.gt.f32.partialorder %v759, 0.75
    %v768 = vsel %vm760, 1, 0
    %v769 = vsel %vm761, 1, 0
    %v770 = vsel %vm762, 1, 0
    %v771 = vsel %vm763, 1, 0
    %v772 = vsel %vm764, 1, 0
    %v773 = vsel %vm765, 1, 0
    %v774 = vsel %vm766, 1, 0
    %v775 = vsel %vm767, 1, 0
    %v776 = vcvt.s32.f32 %v768
    %v777 = vcvt.s32.f32 %v769
    %v778 = vcvt.s32.f32 %v770
    %v779 = vcvt.s32.f32 %v771
    %v780 = vcvt.s32.f32 %v772
    %v781 = vcvt.s32.f32 %v773
    %v782 = vcvt.s32.f32 %v774
    %v783 = vcvt.s32.f32 %v775
    %v784 = vadd.f32 %v704, %v776
    %v785 = vadd.f32 %v705, %v777
    %v786 = vadd.f32 %v706, %v778
    %v787 = vadd.f32 %v707, %v779
    %v788 = vadd.f32 %v708, %v780
    %v789 = vadd.f32 %v709, %v781
    %v790 = vadd.f32 %v710, %v782
    %v791 = vadd.f32 %v711, %v783
    %v792 = vld [vmem:[#allocation2] sm:$0xff]
    %v793 = vld [vmem:[#allocation2 + $0x8] sm:$0xff]
    %v794 = vld [vmem:[#allocation2 + $0x10] sm:$0xff]
    %v795 = vld [vmem:[#allocation2 + $0x18] sm:$0xff]
    %v796 = vld [vmem:[#allocation2 + $0x20] sm:$0xff]
    %v797 = vld [vmem:[#allocation2 + $0x28] sm:$0xff]
    %v798 = vld [vmem:[#allocation2 + $0x30] sm:$0xff]
    %v799 = vld [vmem:[#allocation2 + $0x38] sm:$0xff]
    %v800 = vld [vmem:[#allocation2 + $0x40] sm:$0xff]
    %v801 = vld [vmem:[#allocation2 + $0x48] sm:$0xff]
    %v802 = vld [vmem:[#allocation2 + $0x50] sm:$0xff]
    %v803 = vld [vmem:[#allocation2 + $0x58] sm:$0xff]
    %v804 = vld [vmem:[#allocation2 + $0x60] sm:$0xff]
    %v805 = vld [vmem:[#allocation2 + $0x68] sm:$0xff]
    %v806 = vld [vmem:[#allocation2 + $0x70] sm:$0xff]
    %v807 = vld [vmem:[#allocation2 + $0x78] sm:$0xff]
    %v808 = vld [vmem:[%s4] sm:$0x1]
    %v810 = vlaneseq
    %v811 = vshrl.u32 %v810, 7
    %v812 = vsub.s32 0, %v811
    %v813 = vrot.slane %v808, %v812
    %v823 = vrot.slane %v785, 7
    %vm824 = vcmask 1041409
    %v825 = vsel %vm824, %v823, %v784
    %v826 = vrot.slane %v786, 6
    %vm827 = vcmask 1042434
    %v828 = vsel %vm827, %v826, %v825
    %v829 = vrot.slane %v787, 5
    %vm830 = vcmask 1043459
    %v831 = vsel %vm830, %v829, %v828
    %v832 = vrot.slane %v788, 4
    %vm833 = vcmask 1044484
    %v834 = vsel %vm833, %v832, %v831
    %v835 = vrot.slane %v789, 3
    %vm836 = vcmask 1045509
    %v837 = vsel %vm836, %v835, %v834
    %v838 = vrot.slane %v790, 2
    %vm839 = vcmask 1046534
    %v840 = vsel %vm839, %v838, %v837
    %v841 = vrot.slane %v791, 1
    %vm842 = vcmask 1047559
    %v843 = vsel %vm842, %v841, %v840
    %845 = vmatprep.subr.mxu0 0.0
    %846 = vmatpush1.msra.mxu0 %v792
    %847 = vmatprep.subr.mxu0 0.0
    %848 = vmatpush1.msra.mxu0 %v793
    %849 = vmatprep.subr.mxu0 0.0
    %850 = vmatpush1.msra.mxu0 %v794
    %851 = vmatprep.subr.mxu0 0.0
    %852 = vmatpush1.msra.mxu0 %v795
    %853 = vmatprep.subr.mxu0 0.0
    %854 = vmatpush1.msra.mxu0 %v796
    %855 = vmatprep.subr.mxu0 0.0
    %856 = vmatpush1.msra.mxu0 %v797
    %857 = vmatprep.subr.mxu0 0.0
    %858 = vmatpush1.msra.mxu0 %v798
    %859 = vmatprep.subr.mxu0 0.0
    %860 = vmatpush1.msra.mxu0 %v799
    %861 = vmatprep.subr.mxu0 0.0
    %862 = vmatpush1.msra.mxu0 %v800
    %863 = vmatprep.subr.mxu0 0.0
    %864 = vmatpush1.msra.mxu0 %v801
    %865 = vmatprep.subr.mxu0 0.0
    %866 = vmatpush1.msra.mxu0 %v802
    %867 = vmatprep.subr.mxu0 0.0
    %868 = vmatpush1.msra.mxu0 %v803
    %869 = vmatprep.subr.mxu0 0.0
    %870 = vmatpush1.msra.mxu0 %v804
    %871 = vmatprep.subr.mxu0 0.0
    %872 = vmatpush1.msra.mxu0 %v805
    %873 = vmatprep.subr.mxu0 0.0
    %874 = vmatpush1.msra.mxu0 %v806
    %875 = vmatprep.subr.mxu0 0.0
    %876 = vmatpush1.msra.mxu0 %v807
    %877 = vmatprep.subr.mxu0 0.0
    %878 = vmatpush1.msra.mxu0 0.0
    %879 = vmatprep.subr.mxu0 0.0
    %880 = vmatpush1.msra.mxu0 0.0
    %881 = vmatprep.subr.mxu0 0.0
    %882 = vmatpush1.msra.mxu0 0.0
    %883 = vmatprep.subr.mxu0 0.0
    %884 = vmatpush1.msra.mxu0 0.0
    %885 = vmatprep.subr.mxu0 0.0
    %886 = vmatpush1.msra.mxu0 0.0
    %887 = vmatprep.subr.mxu0 0.0
    %888 = vmatpush1.msra.mxu0 0.0
    %889 = vmatprep.subr.mxu0 0.0
    %890 = vmatpush1.msra.mxu0 0.0
    %891 = vmatprep.subr.mxu0 0.0
    %892 = vmatpush1.msra.mxu0 0.0
    %893 = vmatprep.subr.mxu0 0.0
    %894 = vmatpush1.msra.mxu0 0.0
    %895 = vmatprep.subr.mxu0 0.0
    %896 = vmatpush1.msra.mxu0 0.0
    %897 = vmatprep.subr.mxu0 0.0
    %898 = vmatpush1.msra.mxu0 0.0
    %899 = vmatprep.subr.mxu0 0.0
    %900 = vmatpush1.msra.mxu0 0.0
    %901 = vmatprep.subr.mxu0 0.0
    %902 = vmatpush1.msra.mxu0 0.0
    %903 = vmatprep.subr.mxu0 0.0
    %904 = vmatpush1.msra.mxu0 0.0
    %905 = vmatprep.subr.mxu0 0.0
    %906 = vmatpush1.msra.mxu0 0.0
    %907 = vmatprep.subr.mxu0 0.0
    %908 = vmatpush1.msra.mxu0 0.0
    %909 = vmatprep.mubr.f32.mxu0 0.0
    %910 = vmatmul.mubr.f32.gmra.mrb[0].mxu0 %v843
    %v911 = vpop.f32.mrb[0].mxu0
    %v912 = vadd.f32 %v813, %v911
    %v913 = vpop.f32.mrb[0].mxu0
    %914 = vdwg.mxu0
    %915 = vmax.xlane.f32.xlu0 %v912
    %v916 = vpop.xlane.xlu0 %915
    %v917 = vsub.f32 %v912, %v916
    %v918 = vmul.f32 %v917, 1.442695
    %v919 = vpow.pop %v918
    %920 = vadd.xlane.f32.xlu0 %v919
    %v921 = vpop.xlane.xlu0 %920
    %v922 = vlog2.pop %v921
    %v923 = vmul.f32 %v922, 0.6931472
    %v924 = vadd.f32 %v916, %v923
    %v925 = vsub.f32 %v912, %v924
    %926 = vst [vmem:[#allocation5] sm:$0xff] %v925
    // Predicated region
    $region26: #{tpu_custom_call.1} parent=1 // pred_check
      _
    $region27: #{tpu_custom_call.1} parent=1 // pred_check_branch
      %928 = sbr.rel (0) target = $region29
    $region28: #{tpu_custom_call.1} parent=1 // pred_region
      %s930 = ssub.s32 128, 128
      %931 = vsyncadd [#allocation4], %s930
      %s933 = sshll.u32 [#allocation5], 4
      %s934 = int_to_ptr.vmem [resolvable:$true] %s933
      %936 = dma.vmem_to_hbm [thread:$0]  %s934, 128, %s5, [#allocation4]
    $region29: #{tpu_custom_call.1} parent=1 // pred_fallthru
      _
    // Predicated region
    $region30: #{tpu_custom_call.1} parent=1 // pred_check
      _
    $region31: #{tpu_custom_call.1} parent=1 // pred_check_branch
      %938 = sbr.rel (0) target = $region33
    $region32: #{tpu_custom_call.1} parent=1 // pred_region
      %939 = dma.done [#allocation4], 128
    $region33: #{tpu_custom_call.1} parent=1 // pred_fallthru
      _
    %940 = vsyncpa [#allocation3], 1
    %941 = vsyncpa [#allocation4], 1

</llo_original>
